<compile_context>
chip_gen: v5e
topology: v5e:2x2
jax: 0.10.0
libtpu: 0.0.40
codegen_flags: <defaults>
</compile_context>

<pallas_src>
import functools

import jax
import jax.numpy as jnp
from jax.experimental import pallas as pl
from jax.experimental.pallas import tpu as pltpu


def _round_up(x: int, m: int) -> int:
    return (x + m - 1) // m * m


def _cdiv(a: int, b: int) -> int:
    return (a + b - 1) // b


def _vmem_capacity_bytes() -> int:
    try:
        return int(pltpu.get_tpu_info().vmem_capacity_bytes)
    except Exception:
        return 64 << 20  # conservative (v7x-sized) fallback


def _device_kind() -> str:
    try:
        return jax.devices()[0].device_kind.lower()
    except Exception:
        return ""


def _pick_tk(hid_p: int, tk_target: int) -> int:
    """Largest 128-multiple <= tk_target that exactly divides hid_p
    (hid_p is already a multiple of 128) -> zero wasted hidden columns."""
    n_units = hid_p // 128
    max_units = max(1, min(tk_target, hid_p) // 128)
    for d in range(max_units, 0, -1):
        if n_units % d == 0:
            return d * 128
    return 128


def _weight_spec(block_shape, index_map, n_buffers):
    """Weight-slab BlockSpec; request deeper pipelining when asked & supported."""
    if n_buffers > 2:
        try:
            return pl.BlockSpec(block_shape, index_map,
                                pipeline_mode=pl.Buffered(n_buffers))
        except TypeError:  # older jax without pipeline_mode kwarg
            pass
    return pl.BlockSpec(block_shape, index_map)


# ------------------------------ kernels -------------------------------------


def _expert_resident_kernel(x_ref, w1_ref, b1_ref, w2_ref, b2_ref, o_ref, *,
                            tanh_dtype):
    """Whole expert per batch tile; W1/W2/b1/b2 have constant index maps so
    they are DMA'd from HBM once and stay VMEM-resident across batch tiles."""
    h = jnp.dot(x_ref[...], w1_ref[...], preferred_element_type=jnp.float32)
    h = (h + b1_ref[...].astype(jnp.float32)).astype(tanh_dtype)
    h = jnp.tanh(h)                                            # EUP slot
    y = jnp.dot(h.astype(w2_ref.dtype), w2_ref[...],
                preferred_element_type=jnp.float32)
    o_ref[...] = (y + b2_ref[...].astype(jnp.float32)).astype(o_ref.dtype)


def _expert_stream_kernel_f32out(x_ref, w1_ref, b1_ref, w2_ref, b2_ref, o_ref,
                                 *, tanh_dtype):
    """hidden streamed as innermost reduction axis; f32 output block is
    resident across k, so accumulate directly into it (no scratch/finalize)."""
    k = pl.program_id(1)

    @pl.when(k == 0)
    def _init():
        o_ref[...] = jnp.broadcast_to(b2_ref[...].astype(o_ref.dtype),
                                      o_ref.shape)

    h = jnp.dot(x_ref[...], w1_ref[...], preferred_element_type=jnp.float32)
    h = jnp.tanh((h + b1_ref[...].astype(jnp.float32)).astype(tanh_dtype))
    o_ref[...] += jnp.dot(h.astype(w2_ref.dtype), w2_ref[...],
                          preferred_element_type=jnp.float32)


def _expert_stream_kernel_acc(x_ref, w1_ref, b1_ref, w2_ref, b2_ref, o_ref,
                              acc_ref, *, tanh_dtype):
    """Streaming variant with an f32 VMEM accumulator for non-f32 outputs."""
    k = pl.program_id(1)

    @pl.when(k == 0)
    def _init():
        acc_ref[...] = jnp.broadcast_to(b2_ref[...].astype(jnp.float32),
                                        acc_ref.shape)

    h = jnp.dot(x_ref[...], w1_ref[...], preferred_element_type=jnp.float32)
    h = jnp.tanh((h + b1_ref[...].astype(jnp.float32)).astype(tanh_dtype))
    acc_ref[...] += jnp.dot(h.astype(w2_ref.dtype), w2_ref[...],
                            preferred_element_type=jnp.float32)

    @pl.when(k == pl.num_programs(1) - 1)
    def _finalize():
        o_ref[...] = acc_ref[...].astype(o_ref.dtype)


# ------------------------------ wrappers -------------------------------------


def pad_expert_params(w1, b1, w2, b2):
    """Zero-pad weights/biases to lane-dense (128-multiple) feature dims.
    Call ONCE at parameter setup (hoisted out of the per-call hot path).
    The padding is exact: padded hidden units give tanh(0)=0 against zero W2
    rows; padded output columns are sliced off by the forward wrapper."""
    in_dim, hidden = w1.shape
    out_dim = w2.shape[1]
    in_p, hid_p, out_p = (_round_up(d, 128) for d in (in_dim, hidden, out_dim))
    w1_p = jnp.pad(w1, ((0, in_p - in_dim), (0, hid_p - hidden)))
    b1_p = jnp.pad(jnp.reshape(b1, (1, hidden)), ((0, 0), (0, hid_p - hidden)))
    w2_p = jnp.pad(w2, ((0, hid_p - hidden), (0, out_p - out_dim)))
    b2_p = jnp.pad(jnp.reshape(b2, (1, out_dim)), ((0, 0), (0, out_p - out_dim)))
    return (w1_p, b1_p, w2_p, b2_p), (in_dim, hidden, out_dim)


def expert_forward_padded(x, padded_params, dims, *, tb=256, tk=512,
                          force_stream=False):
    """x: (B, in_dim); padded_params from pad_expert_params. Returns (B, out_dim)."""
    w1_p, b1_p, w2_p, b2_p = padded_params
    in_dim, hidden, out_dim = dims
    B = x.shape[0]
    dtype = x.dtype
    itemsize = jnp.dtype(dtype).itemsize
    in_p, hid_p = w1_p.shape
    out_p = w2_p.shape[1]

    # --- batch tile: cap at the padded batch; prefer >=2 tiles so v7x's two
    # TensorCores both get work on the "parallel" batch axis.
    tb = max(128, min(_round_up(tb, 8), _round_up(max(B, 1), 128)))
    while tb > 128 and _cdiv(B, tb) < 2:
        tb //= 2
    tb = max(8, _round_up(tb, 8))

    # --- per-device VMEM budget (~96 MiB on v5e/v6e, ~48 MiB on v7x).
    vmem_cap = _vmem_capacity_bytes()
    budget = min(int(vmem_cap * 0.75), vmem_cap - (8 << 20))

    # --- tanh dtype: bf16 tanh on chips with a bf16 EUP (v6e / v7x).
    kind = _device_kind()
    use_bf16_tanh = (dtype == jnp.bfloat16
                     and any(t in kind for t in ("v6", "v7", "7x")))
    tanh_dtype = jnp.bfloat16 if use_bf16_tanh else jnp.float32

    # --- VMEM footprint estimates (conservative: 2 buffers per input, plus the
    # (tb, hid/tk) f32 intermediate h and its cast copy, plus f32 result/acc).
    def resident_bytes(tb_):
        return (2 * itemsize * tb_ * in_p
                + 2 * itemsize * (in_p * hid_p + hid_p * out_p)
                + 2 * itemsize * 8 * (hid_p + out_p)
                + 2 * itemsize * tb_ * out_p
                + (4 + itemsize) * tb_ * hid_p
                + 4 * tb_ * out_p)

    def stream_bytes(tb_, tk_, wbuf_):
        return (2 * itemsize * tb_ * in_p
                + wbuf_ * itemsize * (in_p * tk_ + tk_ * out_p)
                + wbuf_ * itemsize * 8 * (tk_ + out_p)
                + 2 * itemsize * tb_ * out_p
                + (4 + itemsize) * tb_ * tk_
                + 4 * tb_ * out_p)

    use_resident = (not force_stream) and resident_bytes(tb) <= budget

    if use_resident:
        B_p = _round_up(B, tb)
        n_b = B_p // tb
        x_p = jnp.pad(x, ((0, B_p - B), (0, in_p - in_dim)))
        est = resident_bytes(tb)
        vmem_limit = int(min(max(int(est * 1.25) + (4 << 20), 32 << 20),
                             vmem_cap - (2 << 20)))
        cost = pl.CostEstimate(
            flops=int(2 * B_p * hid_p * (in_p + out_p)),
            transcendentals=int(B_p * hid_p),
            bytes_accessed=int(itemsize * (B_p * (in_p + out_p)
                                           + in_p * hid_p + hid_p * out_p
                                           + hid_p + out_p)),
        )
        out = pl.pallas_call(
            functools.partial(_expert_resident_kernel, tanh_dtype=tanh_dtype),
            out_shape=jax.ShapeDtypeStruct((B_p, out_p), dtype),
            grid_spec=pltpu.PrefetchScalarGridSpec(
                num_scalar_prefetch=0,
                grid=(n_b,),
                in_specs=[
                    pl.BlockSpec((tb, in_p), lambda i: (i, 0)),      # x tile
                    pl.BlockSpec((in_p, hid_p), lambda i: (0, 0)),   # W1 resident
                    pl.BlockSpec((1, hid_p), lambda i: (0, 0)),      # b1 resident
                    pl.BlockSpec((hid_p, out_p), lambda i: (0, 0)),  # W2 resident
                    pl.BlockSpec((1, out_p), lambda i: (0, 0)),      # b2 resident
                ],
                out_specs=pl.BlockSpec((tb, out_p), lambda i: (i, 0)),
            ),
            compiler_params=pltpu.CompilerParams(
                dimension_semantics=("parallel",),
                vmem_limit_bytes=vmem_limit,
            ),
            cost_estimate=cost,
        )(x_p, w1_p, b1_p, w2_p, b2_p)
        return out[:B, :out_dim]

    # ---------------- streaming path (large experts) ----------------
    tk = _pick_tk(hid_p, max(128, _round_up(tk, 128)))
    wbuf = 3  # triple-buffer the dominant weight DMA stream when budget allows
    if stream_bytes(tb, tk, wbuf) > budget:
        wbuf = 2
    while stream_bytes(tb, tk, wbuf) > budget and tk > 128:
        tk = _pick_tk(hid_p, tk - 128)          # shrink tk first (keep MXU M/N)
    while stream_bytes(tb, tk, wbuf) > budget and tb > 64:
        tb //= 2                                 # last resort

    B_p = _round_up(B, tb)
    n_b = B_p // tb
    n_k = hid_p // tk
    x_p = jnp.pad(x, ((0, B_p - B), (0, in_p - in_dim)))

    est = stream_bytes(tb, tk, wbuf)
    vmem_limit = int(min(max(int(est * 1.25) + (4 << 20), 32 << 20),
                         vmem_cap - (2 << 20)))
    # bytes_accessed reflects the weight re-reads (once per batch tile).
    cost = pl.CostEstimate(
        flops=int(2 * B_p * hid_p * (in_p + out_p)),
        transcendentals=int(B_p * hid_p),
        bytes_accessed=int(itemsize * (B_p * (in_p + out_p)
                                       + n_b * (in_p * hid_p + hid_p * out_p
                                                + hid_p + out_p))),
    )

    f32_out = dtype == jnp.float32
    kernel = functools.partial(
        _expert_stream_kernel_f32out if f32_out else _expert_stream_kernel_acc,
        tanh_dtype=tanh_dtype)
    scratch = [] if f32_out else [pltpu.VMEM((tb, out_p), jnp.float32)]

    out = pl.pallas_call(
        kernel,
        out_shape=jax.ShapeDtypeStruct((B_p, out_p), dtype),
        grid_spec=pltpu.PrefetchScalarGridSpec(
            num_scalar_prefetch=0,
            grid=(n_b, n_k),
            in_specs=[
                pl.BlockSpec((tb, in_p), lambda i, k: (i, 0)),         # x tile
                _weight_spec((in_p, tk), lambda i, k: (0, k), wbuf),   # W1 slab
                pl.BlockSpec((1, tk), lambda i, k: (0, k)),            # b1 slab
                _weight_spec((tk, out_p), lambda i, k: (k, 0), wbuf),  # W2 slab
                pl.BlockSpec((1, out_p), lambda i, k: (0, 0)),         # b2
            ],
            out_specs=pl.BlockSpec((tb, out_p), lambda i, k: (i, 0)),
            scratch_shapes=scratch,
        ),
        compiler_params=pltpu.CompilerParams(
            dimension_semantics=("parallel", "arbitrary"),
            vmem_limit_bytes=vmem_limit,
        ),
        cost_estimate=cost,
    )(x_p, w1_p, b1_p, w2_p, b2_p)
    return out[:B, :out_dim]


class PallasExpert:
    """Pallas TPU equivalent of the PyTorch Expert module. Weights are padded
    to lane-dense shapes once at construction (hoisted out of the hot path)."""

    def __init__(self, w1, b1, w2, b2, *, tb=256, tk=512):
        self.padded, self.dims = pad_expert_params(w1, b1, w2, b2)
        self.tb, self.tk = tb, tk

    def __call__(self, x, **kw):
        return expert_forward_padded(x, self.padded, self.dims,
                                     tb=self.tb, tk=self.tk, **kw)


def init_expert_params(key, in_dim=2, hidden=5, out_dim=4, dtype=jnp.float32):
    """Deterministic init mimicking nn.Linear's U(-1/sqrt(fan_in), 1/sqrt(fan_in)).
    Weights stored transposed relative to PyTorch: (fan_in, fan_out)."""
    k1, k2, k3, k4 = jax.random.split(key, 4)
    lim1 = 1.0 / (in_dim ** 0.5)
    lim2 = 1.0 / (hidden ** 0.5)
    w1 = jax.random.uniform(k1, (in_dim, hidden), jnp.float32, -lim1, lim1)
    b1 = jax.random.uniform(k2, (1, hidden), jnp.float32, -lim1, lim1)
    w2 = jax.random.uniform(k3, (hidden, out_dim), jnp.float32, -lim2, lim2)
    b2 = jax.random.uniform(k4, (1, out_dim), jnp.float32, -lim2, lim2)
    return (w1.astype(dtype), b1.astype(dtype),
            w2.astype(dtype), b2.astype(dtype))


if __name__ == "__main__":
    key = jax.random.PRNGKey(0)
    kx1, kp1, kx2, kp2, kx3, kp3 = jax.random.split(key, 6)

    # Case 1: the module's default (tiny) shapes, f32 -> resident-weights path.
    batch, in_dim, hidden, out_dim = 16, 2, 5, 4
    x = jax.random.normal(kx1, (batch, in_dim), jnp.float32)
    w1, b1, w2, b2 = init_expert_params(kp1, in_dim, hidden, out_dim)
    expert = PallasExpert(w1, b1, w2, b2)
    out = jax.block_until_ready(expert(x))
    ref = jnp.tanh(x @ w1 + b1) @ w2 + b2
    assert out.shape == (batch, out_dim)
    assert jnp.allclose(out, ref, atol=1e-5, rtol=1e-5), float(
        jnp.max(jnp.abs(out - ref)))

    # Case 2: f32, forced hidden-streaming path (accumulates into f32 output).
    batch, in_dim, hidden, out_dim = 192, 64, 384, 96
    x2 = jax.random.normal(kx2, (batch, in_dim), jnp.float32)
    w1, b1, w2, b2 = init_expert_params(kp2, in_dim, hidden, out_dim)
    expert2 = PallasExpert(w1, b1, w2, b2, tk=128)
    out2 = jax.block_until_ready(expert2(x2, force_stream=True))
    ref2 = jnp.tanh(x2 @ w1 + b1) @ w2 + b2
    assert out2.shape == (batch, out_dim)
    assert jnp.allclose(out2, ref2, atol=5e-3, rtol=5e-3), float(
        jnp.max(jnp.abs(out2 - ref2)))

    # Case 3: bf16, forced streaming path (f32 VMEM accumulator; bf16 tanh on
    # v6e/v7x, f32 tanh elsewhere).
    batch, in_dim, hidden, out_dim = 128, 64, 256, 128
    x3 = jax.random.normal(kx3, (batch, in_dim), jnp.float32).astype(jnp.bfloat16)
    w1, b1, w2, b2 = init_expert_params(kp3, in_dim, hidden, out_dim,
                                        dtype=jnp.bfloat16)
    expert3 = PallasExpert(w1, b1, w2, b2, tk=128)
    out3 = jax.block_until_ready(expert3(x3, force_stream=True))
    f = lambda a: a.astype(jnp.float32)
    ref3 = jnp.tanh(f(x3) @ f(w1) + f(b1)) @ f(w2) + f(b2)
    err = float(jnp.max(jnp.abs(f(out3) - ref3)))
    assert out3.shape == (batch, out_dim)
    assert err < 6e-2, err

    print("KERNEL_OK")
</pallas_src>

<mosaic_0001>
module attributes {stable_mosaic.version = 11 : i64} {
  func.func @_expert_resident_kernel(%arg0: i32, %arg1: memref<128x128xf32, #tpu.memory_space<vmem>>, %arg2: memref<128x128xf32, #tpu.memory_space<vmem>>, %arg3: memref<1x128xf32, #tpu.memory_space<vmem>>, %arg4: memref<128x128xf32, #tpu.memory_space<vmem>>, %arg5: memref<1x128xf32, #tpu.memory_space<vmem>>, %arg6: memref<128x128xf32, #tpu.memory_space<vmem>>) attributes {dimension_semantics = [#tpu.dimension_semantics<parallel>], iteration_bounds = array<i64: 1>, scalar_prefetch = 0 : i64, scratch_operands = 0 : i64, tpu.core_type = #tpu.core_type<tc>, window_params = [{transform_indices = @transform_0, window_bounds = array<i64: 128, 128>}, {pipeline_mode = #tpu.pipeline_mode<synchronous>, transform_indices = @transform_1, window_bounds = array<i64: 128, 128>}, {pipeline_mode = #tpu.pipeline_mode<synchronous>, transform_indices = @transform_2, window_bounds = array<i64: 1, 128>}, {pipeline_mode = #tpu.pipeline_mode<synchronous>, transform_indices = @transform_3, window_bounds = array<i64: 128, 128>}, {pipeline_mode = #tpu.pipeline_mode<synchronous>, transform_indices = @transform_4, window_bounds = array<i64: 1, 128>}, {transform_indices = @transform_5, window_bounds = array<i64: 128, 128>}]} {
    %c0 = arith.constant 0 : index
    %c0_0 = arith.constant 0 : index
    %0 = vector.load %arg1[%c0, %c0_0] : memref<128x128xf32, #tpu.memory_space<vmem>>, vector<128x128xf32>
    %c0_1 = arith.constant 0 : index
    %c0_2 = arith.constant 0 : index
    %1 = vector.load %arg2[%c0_1, %c0_2] : memref<128x128xf32, #tpu.memory_space<vmem>>, vector<128x128xf32>
    %cst = arith.constant dense<0.000000e+00> : vector<128x128xf32>
    %2 = tpu.matmul %0, %1, %cst {dimension_numbers = #tpu.dot_dimension_numbers<[1], [0], [0], [1], [0, 0, 1, 1], [], []>} : vector<128x128xf32>, vector<128x128xf32>, vector<128x128xf32> -> vector<128x128xf32>
    %c0_3 = arith.constant 0 : index
    %c0_4 = arith.constant 0 : index
    %3 = vector.load %arg3[%c0_3, %c0_4] : memref<1x128xf32, #tpu.memory_space<vmem>>, vector<1x128xf32>
    %4 = vector.broadcast %3 : vector<1x128xf32> to vector<128x128xf32>
    %5 = arith.addf %2, %4 : vector<128x128xf32>
    %6 = math.tanh %5 : vector<128x128xf32>
    %c0_5 = arith.constant 0 : index
    %c0_6 = arith.constant 0 : index
    %7 = vector.load %arg4[%c0_5, %c0_6] : memref<128x128xf32, #tpu.memory_space<vmem>>, vector<128x128xf32>
    %cst_7 = arith.constant dense<0.000000e+00> : vector<128x128xf32>
    %8 = tpu.matmul %6, %7, %cst_7 {dimension_numbers = #tpu.dot_dimension_numbers<[1], [0], [0], [1], [0, 0, 1, 1], [], []>} : vector<128x128xf32>, vector<128x128xf32>, vector<128x128xf32> -> vector<128x128xf32>
    %c0_8 = arith.constant 0 : index
    %c0_9 = arith.constant 0 : index
    %9 = vector.load %arg5[%c0_8, %c0_9] : memref<1x128xf32, #tpu.memory_space<vmem>>, vector<1x128xf32>
    %10 = vector.broadcast %9 : vector<1x128xf32> to vector<128x128xf32>
    %11 = arith.addf %8, %10 : vector<128x128xf32>
    %c0_10 = arith.constant 0 : index
    %c0_11 = arith.constant 0 : index
    %12 = vector.load %arg6[%c0_10, %c0_11] : memref<128x128xf32, #tpu.memory_space<vmem>>, vector<128x128xf32>
    tpu.vector_store %arg6[%c0_10, %c0_11], %11 {strides = array<i32>} : memref<128x128xf32, #tpu.memory_space<vmem>>, vector<128x128xf32>,
    return
  }
  func.func @transform_0(%arg0: i32) -> (i32, i32) {
    %c0_i32 = arith.constant 0 : i32
    %c0_i32_0 = arith.constant 0 : i32
    return %arg0, %c0_i32 : i32, i32
  }
  func.func @transform_1(%arg0: i32) -> (i32, i32) {
    %c0_i32 = arith.constant 0 : i32
    %c0_i32_0 = arith.constant 0 : i32
    %c0_i32_1 = arith.constant 0 : i32
    return %c0_i32, %c0_i32_0 : i32, i32
  }
  func.func @transform_2(%arg0: i32) -> (i32, i32) {
    %c0_i32 = arith.constant 0 : i32
    %c0_i32_0 = arith.constant 0 : i32
    %c0_i32_1 = arith.constant 0 : i32
    return %c0_i32, %c0_i32_0 : i32, i32
  }
  func.func @transform_3(%arg0: i32) -> (i32, i32) {
    %c0_i32 = arith.constant 0 : i32
    %c0_i32_0 = arith.constant 0 : i32
    %c0_i32_1 = arith.constant 0 : i32
    return %c0_i32, %c0_i32_0 : i32, i32
  }
  func.func @transform_4(%arg0: i32) -> (i32, i32) {
    %c0_i32 = arith.constant 0 : i32
    %c0_i32_0 = arith.constant 0 : i32
    %c0_i32_1 = arith.constant 0 : i32
    return %c0_i32, %c0_i32_0 : i32, i32
  }
  func.func @transform_5(%arg0: i32) -> (i32, i32) {
    %c0_i32 = arith.constant 0 : i32
    %c0_i32_0 = arith.constant 0 : i32
    return %arg0, %c0_i32 : i32, i32
  }
}

</mosaic_0001>

<llo_original>
// kernel: tpu_custom_call.1
$region0: #{tpu_custom_call.1}
  #allocation0 [shape = 'u32[]', space=smem, size = 0x4, offset = 0x4, fixed_abs, tag = 'smem constant byte address 0x4 - core index']
  #allocation1 [shape = 'u32[72,128]{1,0:T(1,128)}', space=vmem, size = 0x9000, scoped, tag = 'internal scratch']
  %s0 = inlined_call_operand.hbm [shape: f32[128,128], index: 0, kind: input, shape index: {}]
  %s1 = inlined_call_operand.hbm [shape: f32[128,128], index: 1, kind: input, shape index: {}]
  %s2 = inlined_call_operand.vmem [shape: f32[1,128], index: 2, kind: input, shape index: {}]
  %s3 = inlined_call_operand.hbm [shape: f32[128,128], index: 3, kind: input, shape index: {}]
  %s4 = inlined_call_operand.vmem [shape: f32[1,128], index: 4, kind: input, shape index: {}]
  %s5 = inlined_call_operand.hbm [shape: f32[128,128], index: 5, kind: output, shape index: {}]
  %s6 = sld [smem:[#allocation0]]
  $region42: #{tpu_custom_call.1} parent=0
    _
  %s8 = ssub.s32 1, %s6
  %s9 = scalar_select 0, %s8, %s6
  $region1: #{tpu_custom_call.1} parent=0
    #allocation2 [shape = 'u8[65536]{0}', space=vmem, size = 0x10000, scoped, tag = 'input window, operand 0, single buffered']
    #allocation3 [shape = 's32[1]{0}', space=sflag, size = 0x4, scoped, tag = 'scoped memory for tpu_custom_call.1']
    #allocation4 [shape = 's32[1]{0}', space=sflag, size = 0x4, scoped, tag = 'scoped memory for tpu_custom_call.1']
    #allocation5 [shape = 'u8[65536]{0}', space=vmem, size = 0x10000, scoped, tag = 'input window, operand 1, single buffered']
    #allocation6 [shape = 's32[1]{0}', space=sflag, size = 0x4, scoped, tag = 'scoped memory for tpu_custom_call.1']
    #allocation7 [shape = 'u8[65536]{0}', space=vmem, size = 0x10000, scoped, tag = 'input window, operand 3, single buffered']
    #allocation8 [shape = 'u8[65536]{0}', space=vmem, size = 0x10000, scoped, tag = 'output window, operand 0, single buffered']
    %10 = vsyncpa [#allocation3], 0
    %11 = vsyncpa [#allocation6], 0
    %12 = vsyncpa [#allocation4], 0
    // Predicated region
    $region2: #{tpu_custom_call.1} parent=1 // pred_check
      _
    $region3: #{tpu_custom_call.1} parent=1 // pred_check_branch
      %14 = sbr.rel (0) target = $region5
    $region4: #{tpu_custom_call.1} parent=1 // pred_region
      %16 = vsyncadd [#allocation3], 0
      %s17 = sshll.u32 %s0, 4
      %s18 = int_to_ptr.hbm [resolvable:$true] %s17
      %s19 = sshll.u32 [#allocation2], 4
      %s20 = int_to_ptr.vmem [resolvable:$true] %s19
      %25 = dma.hbm_to_vmem [thread:$0]  %s18, 2048, %s20, [#allocation3], 128, 128, 8
    $region5: #{tpu_custom_call.1} parent=1 // pred_fallthru
      _
    // Predicated region
    $region6: #{tpu_custom_call.1} parent=1 // pred_check
      _
    $region7: #{tpu_custom_call.1} parent=1 // pred_check_branch
      %27 = sbr.rel (0) target = $region9
    $region8: #{tpu_custom_call.1} parent=1 // pred_region
      %29 = vsyncadd [#allocation6], 0
      %s30 = sshll.u32 %s1, 4
      %s31 = int_to_ptr.hbm [resolvable:$true] %s30
      %s32 = sshll.u32 [#allocation5], 4
      %s33 = int_to_ptr.vmem [resolvable:$true] %s32
      %38 = dma.hbm_to_vmem [thread:$0]  %s31, 2048, %s33, [#allocation6], 128, 128, 8
    $region9: #{tpu_custom_call.1} parent=1 // pred_fallthru
      _
    // Predicated region
    $region10: #{tpu_custom_call.1} parent=1 // pred_check
      _
    $region11: #{tpu_custom_call.1} parent=1 // pred_check_branch
      %40 = sbr.rel (0) target = $region13
    $region12: #{tpu_custom_call.1} parent=1 // pred_region
      _
    $region13: #{tpu_custom_call.1} parent=1 // pred_fallthru
      _
    // Predicated region
    $region14: #{tpu_custom_call.1} parent=1 // pred_check
      _
    $region15: #{tpu_custom_call.1} parent=1 // pred_check_branch
      %42 = sbr.rel (0) target = $region17
    $region16: #{tpu_custom_call.1} parent=1 // pred_region
      %44 = vsyncadd [#allocation6], 0
      %s45 = sshll.u32 %s3, 4
      %s46 = int_to_ptr.hbm [resolvable:$true] %s45
      %s47 = sshll.u32 [#allocation7], 4
      %s48 = int_to_ptr.vmem [resolvable:$true] %s47
      %53 = dma.hbm_to_vmem [thread:$0]  %s46, 2048, %s48, [#allocation6], 128, 128, 8
    $region17: #{tpu_custom_call.1} parent=1 // pred_fallthru
      _
    // Predicated region
    $region18: #{tpu_custom_call.1} parent=1 // pred_check
      _
    $region19: #{tpu_custom_call.1} parent=1 // pred_check_branch
      %55 = sbr.rel (0) target = $region21
    $region20: #{tpu_custom_call.1} parent=1 // pred_region
      _
    $region21: #{tpu_custom_call.1} parent=1 // pred_fallthru
      _
    // Predicated region
    $region22: #{tpu_custom_call.1} parent=1 // pred_check
      _
    $region23: #{tpu_custom_call.1} parent=1 // pred_check_branch
      %57 = sbr.rel (0) target = $region25
    $region24: #{tpu_custom_call.1} parent=1 // pred_region
      %59 = dma.done [#allocation3], 2048
    $region25: #{tpu_custom_call.1} parent=1 // pred_fallthru
      _
    // Predicated region
    $region26: #{tpu_custom_call.1} parent=1 // pred_check
      _
    $region27: #{tpu_custom_call.1} parent=1 // pred_check_branch
      %61 = sbr.rel (0) target = $region29
    $region28: #{tpu_custom_call.1} parent=1 // pred_region
      %63 = dma.done [#allocation6], 2048
    $region29: #{tpu_custom_call.1} parent=1 // pred_fallthru
      _
    // Predicated region
    $region30: #{tpu_custom_call.1} parent=1 // pred_check
      _
    $region31: #{tpu_custom_call.1} parent=1 // pred_check_branch
      %65 = sbr.rel (0) target = $region33
    $region32: #{tpu_custom_call.1} parent=1 // pred_region
      %67 = dma.done [#allocation6], 2048
    $region33: #{tpu_custom_call.1} parent=1 // pred_fallthru
      _
    %v68 = vld [vmem:[#allocation2] sm:$0xff]
    %v69 = vld [vmem:[#allocation2 + $0x8] sm:$0xff]
    %v70 = vld [vmem:[#allocation2 + $0x10] sm:$0xff]
    %v71 = vld [vmem:[#allocation2 + $0x18] sm:$0xff]
    %v72 = vld [vmem:[#allocation2 + $0x20] sm:$0xff]
    %v73 = vld [vmem:[#allocation2 + $0x28] sm:$0xff]
    %v74 = vld [vmem:[#allocation2 + $0x30] sm:$0xff]
    %v75 = vld [vmem:[#allocation2 + $0x38] sm:$0xff]
    %v76 = vld [vmem:[#allocation2 + $0x40] sm:$0xff]
    %v77 = vld [vmem:[#allocation2 + $0x48] sm:$0xff]
    %v78 = vld [vmem:[#allocation2 + $0x50] sm:$0xff]
    %v79 = vld [vmem:[#allocation2 + $0x58] sm:$0xff]
    %v80 = vld [vmem:[#allocation2 + $0x60] sm:$0xff]
    %v81 = vld [vmem:[#allocation2 + $0x68] sm:$0xff]
    %v82 = vld [vmem:[#allocation2 + $0x70] sm:$0xff]
    %v83 = vld [vmem:[#allocation2 + $0x78] sm:$0xff]
    %v84 = vld [vmem:[#allocation5] sm:$0xff]
    %v85 = vld [vmem:[#allocation5 + $0x8] sm:$0xff]
    %v86 = vld [vmem:[#allocation5 + $0x10] sm:$0xff]
    %v87 = vld [vmem:[#allocation5 + $0x18] sm:$0xff]
    %v88 = vld [vmem:[#allocation5 + $0x20] sm:$0xff]
    %v89 = vld [vmem:[#allocation5 + $0x28] sm:$0xff]
    %v90 = vld [vmem:[#allocation5 + $0x30] sm:$0xff]
    %v91 = vld [vmem:[#allocation5 + $0x38] sm:$0xff]
    %v92 = vld [vmem:[#allocation5 + $0x40] sm:$0xff]
    %v93 = vld [vmem:[#allocation5 + $0x48] sm:$0xff]
    %v94 = vld [vmem:[#allocation5 + $0x50] sm:$0xff]
    %v95 = vld [vmem:[#allocation5 + $0x58] sm:$0xff]
    %v96 = vld [vmem:[#allocation5 + $0x60] sm:$0xff]
    %v97 = vld [vmem:[#allocation5 + $0x68] sm:$0xff]
    %v98 = vld [vmem:[#allocation5 + $0x70] sm:$0xff]
    %v99 = vld [vmem:[#allocation5 + $0x78] sm:$0xff]
    %v100 = vld [vmem:[%s2] sm:$0x1]
    %v102 = vperm.slane %v100, 0
    %104 = vmatpush.msra.mxu0 %v99
    %105 = vmatpush.msra.mxu0 %v98
    %106 = vmatpush.msra.mxu0 %v97
    %107 = vmatpush.msra.mxu0 %v96
    %108 = vmatpush.msra.mxu0 %v95
    %109 = vmatpush.msra.mxu0 %v94
    %110 = vmatpush.msra.mxu0 %v93
    %111 = vmatpush.msra.mxu0 %v92
    %112 = vmatpush.msra.mxu0 %v91
    %113 = vmatpush.msra.mxu0 %v90
    %114 = vmatpush.msra.mxu0 %v89
    %115 = vmatpush.msra.mxu0 %v88
    %116 = vmatpush.msra.mxu0 %v87
    %117 = vmatpush.msra.mxu0 %v86
    %118 = vmatpush.msra.mxu0 %v85
    %119 = vmatpush.msra.mxu0 %v84
    %120 = vmatmul.f32.gmra.mxu0 %v68
    %v121 = vpop.f32.mrf.mxu0
    %v122 = vadd.f32 %v102, %v121
    %123 = vmatmul.f32.gmra.mxu0 %v69
    %v124 = vpop.f32.mrf.mxu0
    %v125 = vadd.f32 %v102, %v124
    %126 = vmatmul.f32.gmra.mxu0 %v70
    %v127 = vpop.f32.mrf.mxu0
    %v128 = vadd.f32 %v102, %v127
    %129 = vmatmul.f32.gmra.mxu0 %v71
    %v130 = vpop.f32.mrf.mxu0
    %v131 = vadd.f32 %v102, %v130
    %132 = vmatmul.f32.gmra.mxu0 %v72
    %v133 = vpop.f32.mrf.mxu0
    %v134 = vadd.f32 %v102, %v133
    %135 = vmatmul.f32.gmra.mxu0 %v73
    %v136 = vpop.f32.mrf.mxu0
    %v137 = vadd.f32 %v102, %v136
    %138 = vmatmul.f32.gmra.mxu0 %v74
    %v139 = vpop.f32.mrf.mxu0
    %v140 = vadd.f32 %v102, %v139
    %141 = vmatmul.f32.gmra.mxu0 %v75
    %v142 = vpop.f32.mrf.mxu0
    %v143 = vadd.f32 %v102, %v142
    %144 = vmatmul.f32.gmra.mxu0 %v76
    %v145 = vpop.f32.mrf.mxu0
    %v146 = vadd.f32 %v102, %v145
    %147 = vmatmul.f32.gmra.mxu0 %v77
    %v148 = vpop.f32.mrf.mxu0
    %v149 = vadd.f32 %v102, %v148
    %150 = vmatmul.f32.gmra.mxu0 %v78
    %v151 = vpop.f32.mrf.mxu0
    %v152 = vadd.f32 %v102, %v151
    %153 = vmatmul.f32.gmra.mxu0 %v79
    %v154 = vpop.f32.mrf.mxu0
    %v155 = vadd.f32 %v102, %v154
    %156 = vmatmul.f32.gmra.mxu0 %v80
    %v157 = vpop.f32.mrf.mxu0
    %v158 = vadd.f32 %v102, %v157
    %159 = vmatmul.f32.gmra.mxu0 %v81
    %v160 = vpop.f32.mrf.mxu0
    %v161 = vadd.f32 %v102, %v160
    %162 = vmatmul.f32.gmra.mxu0 %v82
    %v163 = vpop.f32.mrf.mxu0
    %v164 = vadd.f32 %v102, %v163
    %165 = vmatmul.f32.gmra.mxu0 %v83
    %v166 = vpop.f32.mrf.mxu0
    %v167 = vadd.f32 %v102, %v166
    %168 = vdwg.mxu0
    %v169 = vtanh.pop %v122
    %v170 = vtanh.pop %v125
    %v171 = vtanh.pop %v128
    %v172 = vtanh.pop %v131
    %v173 = vtanh.pop %v134
    %v174 = vtanh.pop %v137
    %v175 = vtanh.pop %v140
    %v176 = vtanh.pop %v143
    %v177 = vtanh.pop %v146
    %v178 = vtanh.pop %v149
    %v179 = vtanh.pop %v152
    %v180 = vtanh.pop %v155
    %v181 = vtanh.pop %v158
    %v182 = vtanh.pop %v161
    %v183 = vtanh.pop %v164
    %v184 = vtanh.pop %v167
    %v185 = vld [vmem:[#allocation7] sm:$0xff]
    %v186 = vld [vmem:[#allocation7 + $0x8] sm:$0xff]
    %v187 = vld [vmem:[#allocation7 + $0x10] sm:$0xff]
    %v188 = vld [vmem:[#allocation7 + $0x18] sm:$0xff]
    %v189 = vld [vmem:[#allocation7 + $0x20] sm:$0xff]
    %v190 = vld [vmem:[#allocation7 + $0x28] sm:$0xff]
    %v191 = vld [vmem:[#allocation7 + $0x30] sm:$0xff]
    %v192 = vld [vmem:[#allocation7 + $0x38] sm:$0xff]
    %v193 = vld [vmem:[#allocation7 + $0x40] sm:$0xff]
    %v194 = vld [vmem:[#allocation7 + $0x48] sm:$0xff]
    %v195 = vld [vmem:[#allocation7 + $0x50] sm:$0xff]
    %v196 = vld [vmem:[#allocation7 + $0x58] sm:$0xff]
    %v197 = vld [vmem:[#allocation7 + $0x60] sm:$0xff]
    %v198 = vld [vmem:[#allocation7 + $0x68] sm:$0xff]
    %v199 = vld [vmem:[#allocation7 + $0x70] sm:$0xff]
    %v200 = vld [vmem:[#allocation7 + $0x78] sm:$0xff]
    %v201 = vld [vmem:[%s4] sm:$0x1]
    %v203 = vperm.slane %v201, 0
    %205 = vmatpush.msra.mxu0 %v200
    %206 = vmatpush.msra.mxu0 %v199
    %207 = vmatpush.msra.mxu0 %v198
    %208 = vmatpush.msra.mxu0 %v197
    %209 = vmatpush.msra.mxu0 %v196
    %210 = vmatpush.msra.mxu0 %v195
    %211 = vmatpush.msra.mxu0 %v194
    %212 = vmatpush.msra.mxu0 %v193
    %213 = vmatpush.msra.mxu0 %v192
    %214 = vmatpush.msra.mxu0 %v191
    %215 = vmatpush.msra.mxu0 %v190
    %216 = vmatpush.msra.mxu0 %v189
    %217 = vmatpush.msra.mxu0 %v188
    %218 = vmatpush.msra.mxu0 %v187
    %219 = vmatpush.msra.mxu0 %v186
    %220 = vmatpush.msra.mxu0 %v185
    %221 = vmatmul.f32.gmra.mxu0 %v169
    %v222 = vpop.f32.mrf.mxu0
    %v223 = vadd.f32 %v203, %v222
    %224 = vmatmul.f32.gmra.mxu0 %v170
    %v225 = vpop.f32.mrf.mxu0
    %v226 = vadd.f32 %v203, %v225
    %227 = vmatmul.f32.gmra.mxu0 %v171
    %v228 = vpop.f32.mrf.mxu0
    %v229 = vadd.f32 %v203, %v228
    %230 = vmatmul.f32.gmra.mxu0 %v172
    %v231 = vpop.f32.mrf.mxu0
    %v232 = vadd.f32 %v203, %v231
    %233 = vmatmul.f32.gmra.mxu0 %v173
    %v234 = vpop.f32.mrf.mxu0
    %v235 = vadd.f32 %v203, %v234
    %236 = vmatmul.f32.gmra.mxu0 %v174
    %v237 = vpop.f32.mrf.mxu0
    %v238 = vadd.f32 %v203, %v237
    %239 = vmatmul.f32.gmra.mxu0 %v175
    %v240 = vpop.f32.mrf.mxu0
    %v241 = vadd.f32 %v203, %v240
    %242 = vmatmul.f32.gmra.mxu0 %v176
    %v243 = vpop.f32.mrf.mxu0
    %v244 = vadd.f32 %v203, %v243
    %245 = vmatmul.f32.gmra.mxu0 %v177
    %v246 = vpop.f32.mrf.mxu0
    %v247 = vadd.f32 %v203, %v246
    %248 = vmatmul.f32.gmra.mxu0 %v178
    %v249 = vpop.f32.mrf.mxu0
    %v250 = vadd.f32 %v203, %v249
    %251 = vmatmul.f32.gmra.mxu0 %v179
    %v252 = vpop.f32.mrf.mxu0
    %v253 = vadd.f32 %v203, %v252
    %254 = vmatmul.f32.gmra.mxu0 %v180
    %v255 = vpop.f32.mrf.mxu0
    %v256 = vadd.f32 %v203, %v255
    %257 = vmatmul.f32.gmra.mxu0 %v181
    %v258 = vpop.f32.mrf.mxu0
    %v259 = vadd.f32 %v203, %v258
    %260 = vmatmul.f32.gmra.mxu0 %v182
    %v261 = vpop.f32.mrf.mxu0
    %v262 = vadd.f32 %v203, %v261
    %263 = vmatmul.f32.gmra.mxu0 %v183
    %v264 = vpop.f32.mrf.mxu0
    %v265 = vadd.f32 %v203, %v264
    %266 = vmatmul.f32.gmra.mxu0 %v184
    %v267 = vpop.f32.mrf.mxu0
    %v268 = vadd.f32 %v203, %v267
    %269 = vdwg.mxu0
    %270 = vst [vmem:[#allocation8] sm:$0xff] %v223
    %271 = vst [vmem:[#allocation8 + $0x8] sm:$0xff] %v226
    %272 = vst [vmem:[#allocation8 + $0x10] sm:$0xff] %v229
    %273 = vst [vmem:[#allocation8 + $0x18] sm:$0xff] %v232
    %274 = vst [vmem:[#allocation8 + $0x20] sm:$0xff] %v235
    %275 = vst [vmem:[#allocation8 + $0x28] sm:$0xff] %v238
    %276 = vst [vmem:[#allocation8 + $0x30] sm:$0xff] %v241
    %277 = vst [vmem:[#allocation8 + $0x38] sm:$0xff] %v244
    %278 = vst [vmem:[#allocation8 + $0x40] sm:$0xff] %v247
    %279 = vst [vmem:[#allocation8 + $0x48] sm:$0xff] %v250
    %280 = vst [vmem:[#allocation8 + $0x50] sm:$0xff] %v253
    %281 = vst [vmem:[#allocation8 + $0x58] sm:$0xff] %v256
    %282 = vst [vmem:[#allocation8 + $0x60] sm:$0xff] %v259
    %283 = vst [vmem:[#allocation8 + $0x68] sm:$0xff] %v262
    %284 = vst [vmem:[#allocation8 + $0x70] sm:$0xff] %v265
    %285 = vst [vmem:[#allocation8 + $0x78] sm:$0xff] %v268
    // Predicated region
    $region34: #{tpu_custom_call.1} parent=1 // pred_check
      _
    $region35: #{tpu_custom_call.1} parent=1 // pred_check_branch
      %287 = sbr.rel (0) target = $region37
    $region36: #{tpu_custom_call.1} parent=1 // pred_region
      %289 = vsyncadd [#allocation4], 0
      %s290 = sshll.u32 [#allocation8], 4
      %s291 = int_to_ptr.vmem [resolvable:$true] %s290
      %s292 = sshll.u32 %s5, 4
      %s293 = int_to_ptr.hbm [resolvable:$true] %s292
      %298 = dma.vmem_to_hbm [thread:$0]  %s291, 2048, %s293, [#allocation4], 128, 128, 8
    $region37: #{tpu_custom_call.1} parent=1 // pred_fallthru
      _
    // Predicated region
    $region38: #{tpu_custom_call.1} parent=1 // pred_check
      _
    $region39: #{tpu_custom_call.1} parent=1 // pred_check_branch
      %300 = sbr.rel (0) target = $region41
    $region40: #{tpu_custom_call.1} parent=1 // pred_region
      %302 = dma.done [#allocation4], 2048
    $region41: #{tpu_custom_call.1} parent=1 // pred_fallthru
      _
    %303 = vsyncpa [#allocation3], 1
    %304 = vsyncpa [#allocation6], 1
    %305 = vsyncpa [#allocation4], 1

</llo_original>
